<compile_context>
chip_gen: v5e
topology: v5e:2x2
jax: 0.10.0
libtpu: 0.0.40
codegen_flags: <defaults>
</compile_context>

<pallas_src>
import math

import jax
import jax.numpy as jnp
from jax.experimental import pallas as pl
from jax.experimental.pallas import tpu as pltpu


def _mlp_kernel(x_ref, w1_ref, b1_ref, w2_ref, b2_ref, out_ref):
    # Hidden layer: Linear(C, 10) + Tanh (tanh goes to the EUP slot).
    h = jnp.dot(x_ref[...], w1_ref[...], preferred_element_type=jnp.float32)
    h = jnp.tanh(h + b1_ref[...])                  # (TB, 10) + (1, 10) broadcast
    # Output layer: Linear(10, 13)
    o = jnp.dot(h, w2_ref[...], preferred_element_type=jnp.float32)
    out_ref[...] = (o + b2_ref[...]).astype(out_ref.dtype)


def lin_reg_seq(x, w1, b1, w2, b2, *, batch_tile=1024):
    """Fused forward pass of LinRegSeq.

    x:  (B, C) float32
    w1: (C, 10), b1: (10,)
    w2: (10, 13), b2: (13,)
    returns: (B, 13) float32
    """
    B, C = x.shape
    H = w1.shape[1]
    O = w2.shape[1]
    b1_2d = b1.reshape(1, H)
    b2_2d = b2.reshape(1, O)

    if B <= batch_tile:
        # Tiny batch: whole problem is a fraction of one vreg column. Skip the
        # grid + pipeline machinery entirely; everything lives in VMEM.
        return pl.pallas_call(
            _mlp_kernel,
            out_shape=jax.ShapeDtypeStruct((B, O), jnp.float32),
            in_specs=[pl.BlockSpec(memory_space=pltpu.MemorySpace.VMEM)] * 5,
            out_specs=pl.BlockSpec(memory_space=pltpu.MemorySpace.VMEM),
        )(x, w1, b1_2d, w2, b2_2d)

    # Realistic batch: tile the batch dimension so x/out blocks are auto
    # double-buffered against HBM while the tiny weights stay VMEM-resident.
    TB = batch_tile                       # multiple of 8; ~few MiB/step on v7x
    n_blocks = pl.cdiv(B, TB)
    Bp = n_blocks * TB
    x_p = jnp.pad(x, ((0, Bp - B), (0, 0))) if Bp != B else x

    out = pl.pallas_call(
        _mlp_kernel,
        out_shape=jax.ShapeDtypeStruct((Bp, O), jnp.float32),
        grid=(n_blocks,),
        in_specs=[
            pl.BlockSpec((TB, C), lambda i: (i, 0)),   # streamed activations
            pl.BlockSpec((C, H), lambda i: (0, 0)),    # resident weights
            pl.BlockSpec((1, H), lambda i: (0, 0)),
            pl.BlockSpec((H, O), lambda i: (0, 0)),
            pl.BlockSpec((1, O), lambda i: (0, 0)),
        ],
        out_specs=pl.BlockSpec((TB, O), lambda i: (i, 0)),
        compiler_params=pltpu.CompilerParams(
            # "parallel" -> megacore sharding on v7x, harmless on v5e/v6e.
            dimension_semantics=("parallel",)),
    )(x_p, w1, b1_2d, w2, b2_2d)
    return out[:B] if Bp != B else out


def _init_linear(key, fan_in, fan_out):
    """Deterministic PyTorch-style nn.Linear init: U(-1/sqrt(fan_in), 1/sqrt(fan_in))."""
    kw, kb = jax.random.split(key)
    bound = 1.0 / math.sqrt(fan_in)
    w = jax.random.uniform(kw, (fan_in, fan_out), jnp.float32, -bound, bound)
    b = jax.random.uniform(kb, (fan_out,), jnp.float32, -bound, bound)
    return w, b


if __name__ == "__main__":
    # X_train.shape[1] -> number of input features; pick 13 (regression-style data).
    C, H, O = 13, 10, 13

    root = jax.random.PRNGKey(0)
    kx, k1, k2, kx2 = jax.random.split(root, 4)

    w1, b1 = _init_linear(k1, C, H)
    w2, b2 = _init_linear(k2, H, O)

    # --- small-batch path (grid-less) ---
    B_small = 8
    x_small = jax.random.normal(kx, (B_small, C), jnp.float32)
    out_small = jax.block_until_ready(lin_reg_seq(x_small, w1, b1, w2, b2))
    ref_small = jnp.tanh(x_small @ w1 + b1) @ w2 + b2
    assert out_small.shape == (B_small, O)
    assert jnp.allclose(out_small, ref_small, atol=1e-5, rtol=1e-5)

    # --- batch-tiled path (grid over batch, padded tail) ---
    B_big, TB = 2500, 1024                  # non-multiple of TB -> exercises padding
    x_big = jax.random.normal(kx2, (B_big, C), jnp.float32)
    out_big = jax.block_until_ready(
        lin_reg_seq(x_big, w1, b1, w2, b2, batch_tile=TB))
    ref_big = jnp.tanh(x_big @ w1 + b1) @ w2 + b2
    assert out_big.shape == (B_big, O)
    assert jnp.allclose(out_big, ref_big, atol=1e-5, rtol=1e-5)

    print("KERNEL_OK")
</pallas_src>

<mosaic_0001>
module attributes {stable_mosaic.version = 11 : i64} {
  func.func @_mlp_kernel(%arg0: memref<8x13xf32, #tpu.memory_space<vmem>>, %arg1: memref<13x10xf32, #tpu.memory_space<vmem>>, %arg2: memref<1x10xf32, #tpu.memory_space<vmem>>, %arg3: memref<10x13xf32, #tpu.memory_space<vmem>>, %arg4: memref<1x13xf32, #tpu.memory_space<vmem>>, %arg5: memref<8x13xf32, #tpu.memory_space<vmem>>) attributes {dimension_semantics = [], scalar_prefetch = 0 : i64, scratch_operands = 0 : i64, tpu.core_type = #tpu.core_type<tc>} {
    %c0 = arith.constant 0 : index
    %c0_0 = arith.constant 0 : index
    %0 = vector.load %arg0[%c0, %c0_0] : memref<8x13xf32, #tpu.memory_space<vmem>>, vector<8x13xf32>
    %c0_1 = arith.constant 0 : index
    %c0_2 = arith.constant 0 : index
    %1 = vector.load %arg1[%c0_1, %c0_2] : memref<13x10xf32, #tpu.memory_space<vmem>>, vector<13x10xf32>
    %cst = arith.constant dense<0.000000e+00> : vector<8x10xf32>
    %2 = tpu.matmul %0, %1, %cst {dimension_numbers = #tpu.dot_dimension_numbers<[1], [0], [0], [1], [0, 0, 1, 1], [], []>} : vector<8x13xf32>, vector<13x10xf32>, vector<8x10xf32> -> vector<8x10xf32>
    %c0_3 = arith.constant 0 : index
    %c0_4 = arith.constant 0 : index
    %3 = vector.load %arg2[%c0_3, %c0_4] : memref<1x10xf32, #tpu.memory_space<vmem>>, vector<1x10xf32>
    %4 = vector.broadcast %3 : vector<1x10xf32> to vector<8x10xf32>
    %5 = arith.addf %2, %4 : vector<8x10xf32>
    %6 = math.tanh %5 : vector<8x10xf32>
    %c0_5 = arith.constant 0 : index
    %c0_6 = arith.constant 0 : index
    %7 = vector.load %arg3[%c0_5, %c0_6] : memref<10x13xf32, #tpu.memory_space<vmem>>, vector<10x13xf32>
    %cst_7 = arith.constant dense<0.000000e+00> : vector<8x13xf32>
    %8 = tpu.matmul %6, %7, %cst_7 {dimension_numbers = #tpu.dot_dimension_numbers<[1], [0], [0], [1], [0, 0, 1, 1], [], []>} : vector<8x10xf32>, vector<10x13xf32>, vector<8x13xf32> -> vector<8x13xf32>
    %c0_8 = arith.constant 0 : index
    %c0_9 = arith.constant 0 : index
    %9 = vector.load %arg4[%c0_8, %c0_9] : memref<1x13xf32, #tpu.memory_space<vmem>>, vector<1x13xf32>
    %10 = vector.broadcast %9 : vector<1x13xf32> to vector<8x13xf32>
    %11 = arith.addf %8, %10 : vector<8x13xf32>
    %c0_10 = arith.constant 0 : index
    %c0_11 = arith.constant 0 : index
    %12 = vector.load %arg5[%c0_10, %c0_11] : memref<8x13xf32, #tpu.memory_space<vmem>>, vector<8x13xf32>
    tpu.vector_store %arg5[%c0_10, %c0_11], %11 {strides = array<i32>} : memref<8x13xf32, #tpu.memory_space<vmem>>, vector<8x13xf32>,
    return
  }
}

</mosaic_0001>

<llo_original>
// kernel: tpu_custom_call.1
$region0: #{tpu_custom_call.1}
  #allocation0 [shape = 'u32[]', space=smem, size = 0x4, offset = 0x4, fixed_abs, tag = 'smem constant byte address 0x4 - core index']
  #allocation1 [shape = 'u32[72,128]{1,0:T(1,128)}', space=vmem, size = 0x9000, scoped, tag = 'internal scratch']
  %s0 = inlined_call_operand.hbm [shape: f32[8,13], index: 0, kind: input, shape index: {}]
  %s1 = inlined_call_operand.hbm [shape: f32[13,10], index: 1, kind: input, shape index: {}]
  %s2 = inlined_call_operand.vmem [shape: f32[1,10], index: 2, kind: input, shape index: {}]
  %s3 = inlined_call_operand.hbm [shape: f32[10,13], index: 3, kind: input, shape index: {}]
  %s4 = inlined_call_operand.vmem [shape: f32[1,13], index: 4, kind: input, shape index: {}]
  %s5 = inlined_call_operand.hbm [shape: f32[8,13], index: 5, kind: output, shape index: {}]
  %s6 = sld [smem:[#allocation0]]
  $region42: #{tpu_custom_call.1} parent=0
    _
  %s8 = ssub.s32 1, %s6
  %s9 = scalar_select 0, %s8, %s6
  $region1: #{tpu_custom_call.1} parent=0
    #allocation2 [shape = 'u8[4096]{0}', space=vmem, size = 0x1000, scoped, tag = 'input window, operand 0, single buffered']
    #allocation3 [shape = 's32[1]{0}', space=sflag, size = 0x4, scoped, tag = 'scoped memory for tpu_custom_call.1']
    #allocation4 [shape = 's32[1]{0}', space=sflag, size = 0x4, scoped, tag = 'scoped memory for tpu_custom_call.1']
    #allocation5 [shape = 'u8[8192]{0}', space=vmem, size = 0x2000, scoped, tag = 'input window, operand 1, single buffered']
    #allocation6 [shape = 's32[1]{0}', space=sflag, size = 0x4, scoped, tag = 'scoped memory for tpu_custom_call.1']
    #allocation7 [shape = 'u8[8192]{0}', space=vmem, size = 0x2000, scoped, tag = 'input window, operand 3, single buffered']
    #allocation8 [shape = 'u8[4096]{0}', space=vmem, size = 0x1000, scoped, tag = 'output window, operand 0, single buffered']
    %10 = vsyncpa [#allocation3], 0
    %11 = vsyncpa [#allocation6], 0
    %12 = vsyncpa [#allocation4], 0
    // Predicated region
    $region2: #{tpu_custom_call.1} parent=1 // pred_check
      _
    $region3: #{tpu_custom_call.1} parent=1 // pred_check_branch
      %14 = sbr.rel (0) target = $region5
    $region4: #{tpu_custom_call.1} parent=1 // pred_region
      %16 = vsyncadd [#allocation3], 0
      %s18 = sshll.u32 %s0, 4
      %s19 = int_to_ptr.hbm [resolvable:$true] %s18
      %s20 = sshll.u32 [#allocation2], 4
      %s21 = int_to_ptr.vmem [resolvable:$true] %s20
      %23 = dma.hbm_to_vmem [thread:$0]  %s19, 128, %s21, [#allocation3]
    $region5: #{tpu_custom_call.1} parent=1 // pred_fallthru
      _
    // Predicated region
    $region6: #{tpu_custom_call.1} parent=1 // pred_check
      _
    $region7: #{tpu_custom_call.1} parent=1 // pred_check_branch
      %25 = sbr.rel (0) target = $region9
    $region8: #{tpu_custom_call.1} parent=1 // pred_region
      %27 = vsyncadd [#allocation6], 0
      %s28 = sshll.u32 %s1, 4
      %s29 = int_to_ptr.hbm [resolvable:$true] %s28
      %s30 = sshll.u32 [#allocation5], 4
      %s31 = int_to_ptr.vmem [resolvable:$true] %s30
      %36 = dma.hbm_to_vmem [thread:$0]  %s29, 256, %s31, [#allocation6], 128, 128, 8
    $region9: #{tpu_custom_call.1} parent=1 // pred_fallthru
      _
    // Predicated region
    $region10: #{tpu_custom_call.1} parent=1 // pred_check
      _
    $region11: #{tpu_custom_call.1} parent=1 // pred_check_branch
      %38 = sbr.rel (0) target = $region13
    $region12: #{tpu_custom_call.1} parent=1 // pred_region
      _
    $region13: #{tpu_custom_call.1} parent=1 // pred_fallthru
      _
    // Predicated region
    $region14: #{tpu_custom_call.1} parent=1 // pred_check
      _
    $region15: #{tpu_custom_call.1} parent=1 // pred_check_branch
      %40 = sbr.rel (0) target = $region17
    $region16: #{tpu_custom_call.1} parent=1 // pred_region
      %42 = vsyncadd [#allocation6], 0
      %s43 = sshll.u32 %s3, 4
      %s44 = int_to_ptr.hbm [resolvable:$true] %s43
      %s45 = sshll.u32 [#allocation7], 4
      %s46 = int_to_ptr.vmem [resolvable:$true] %s45
      %51 = dma.hbm_to_vmem [thread:$0]  %s44, 256, %s46, [#allocation6], 128, 128, 8
    $region17: #{tpu_custom_call.1} parent=1 // pred_fallthru
      _
    // Predicated region
    $region18: #{tpu_custom_call.1} parent=1 // pred_check
      _
    $region19: #{tpu_custom_call.1} parent=1 // pred_check_branch
      %53 = sbr.rel (0) target = $region21
    $region20: #{tpu_custom_call.1} parent=1 // pred_region
      _
    $region21: #{tpu_custom_call.1} parent=1 // pred_fallthru
      _
    // Predicated region
    $region22: #{tpu_custom_call.1} parent=1 // pred_check
      _
    $region23: #{tpu_custom_call.1} parent=1 // pred_check_branch
      %55 = sbr.rel (0) target = $region25
    $region24: #{tpu_custom_call.1} parent=1 // pred_region
      %57 = dma.done [#allocation3], 128
    $region25: #{tpu_custom_call.1} parent=1 // pred_fallthru
      _
    // Predicated region
    $region26: #{tpu_custom_call.1} parent=1 // pred_check
      _
    $region27: #{tpu_custom_call.1} parent=1 // pred_check_branch
      %59 = sbr.rel (0) target = $region29
    $region28: #{tpu_custom_call.1} parent=1 // pred_region
      %61 = dma.done [#allocation6], 256
    $region29: #{tpu_custom_call.1} parent=1 // pred_fallthru
      _
    // Predicated region
    $region30: #{tpu_custom_call.1} parent=1 // pred_check
      _
    $region31: #{tpu_custom_call.1} parent=1 // pred_check_branch
      %63 = sbr.rel (0) target = $region33
    $region32: #{tpu_custom_call.1} parent=1 // pred_region
      %65 = dma.done [#allocation6], 256
    $region33: #{tpu_custom_call.1} parent=1 // pred_fallthru
      _
    %v66 = vld [vmem:[#allocation2] sm:$0xff]
    %v67 = vld [vmem:[#allocation5] sm:$0xff]
    %v68 = vld [vmem:[#allocation5 + $0x8] sm:$0x1f]
    %v69 = vld [vmem:[%s2] sm:$0x1]
    %v71 = vperm.slane %v69, 0
    %vm73 = vcmask 105472
    %v75 = vsel %vm73, %v66, 0
    %vm77 = vcmask 1044480
    %v79 = vsel %vm77, %v68, 0
    %81 = vmatpush.msra.mxu0 0.0
    %82 = vmatpush.msra.mxu0 0.0
    %83 = vmatpush.msra.mxu0 0.0
    %84 = vmatpush.msra.mxu0 0.0
    %85 = vmatpush.msra.mxu0 0.0
    %86 = vmatpush.msra.mxu0 0.0
    %87 = vmatpush.msra.mxu0 0.0
    %88 = vmatpush.msra.mxu0 0.0
    %89 = vmatpush.msra.mxu0 0.0
    %90 = vmatpush.msra.mxu0 0.0
    %91 = vmatpush.msra.mxu0 0.0
    %92 = vmatpush.msra.mxu0 0.0
    %93 = vmatpush.msra.mxu0 0.0
    %94 = vmatpush.msra.mxu0 0.0
    %95 = vmatpush.msra.mxu0 %v79
    %96 = vmatpush.msra.mxu0 %v67
    %97 = vmatmul.f32.gmra.mxu0 %v75
    %v98 = vpop.f32.mrf.mxu0
    %v99 = vadd.f32 %v71, %v98
    %100 = vdwg.mxu0
    %v101 = vtanh.pop %v99
    %v102 = vld [vmem:[#allocation7] sm:$0xff]
    %v103 = vld [vmem:[#allocation7 + $0x8] sm:$0x3]
    %v104 = vld [vmem:[%s4] sm:$0x1]
    %v106 = vperm.slane %v104, 0
    %vm108 = vcmask 80896
    %v110 = vsel %vm108, %v101, 0
    %vm112 = vcmask 1041408
    %v114 = vsel %vm112, %v103, 0
    %116 = vmatpush.msra.mxu0 0.0
    %117 = vmatpush.msra.mxu0 0.0
    %118 = vmatpush.msra.mxu0 0.0
    %119 = vmatpush.msra.mxu0 0.0
    %120 = vmatpush.msra.mxu0 0.0
    %121 = vmatpush.msra.mxu0 0.0
    %122 = vmatpush.msra.mxu0 0.0
    %123 = vmatpush.msra.mxu0 0.0
    %124 = vmatpush.msra.mxu0 0.0
    %125 = vmatpush.msra.mxu0 0.0
    %126 = vmatpush.msra.mxu0 0.0
    %127 = vmatpush.msra.mxu0 0.0
    %128 = vmatpush.msra.mxu0 0.0
    %129 = vmatpush.msra.mxu0 0.0
    %130 = vmatpush.msra.mxu0 %v114
    %131 = vmatpush.msra.mxu0 %v102
    %132 = vmatmul.f32.gmra.mxu0 %v110
    %v133 = vpop.f32.mrf.mxu0
    %v134 = vadd.f32 %v106, %v133
    %135 = vdwg.mxu0
    %136 = vst.msk [vmem:[#allocation8] sm:$0xff] %vm73, %v134
    // Predicated region
    $region34: #{tpu_custom_call.1} parent=1 // pred_check
      _
    $region35: #{tpu_custom_call.1} parent=1 // pred_check_branch
      %138 = sbr.rel (0) target = $region37
    $region36: #{tpu_custom_call.1} parent=1 // pred_region
      %140 = vsyncadd [#allocation4], 0
      %s142 = sshll.u32 [#allocation8], 4
      %s143 = int_to_ptr.vmem [resolvable:$true] %s142
      %s144 = sshll.u32 %s5, 4
      %s145 = int_to_ptr.hbm [resolvable:$true] %s144
      %147 = dma.vmem_to_hbm [thread:$0]  %s143, 128, %s145, [#allocation4]
    $region37: #{tpu_custom_call.1} parent=1 // pred_fallthru
      _
    // Predicated region
    $region38: #{tpu_custom_call.1} parent=1 // pred_check
      _
    $region39: #{tpu_custom_call.1} parent=1 // pred_check_branch
      %149 = sbr.rel (0) target = $region41
    $region40: #{tpu_custom_call.1} parent=1 // pred_region
      %151 = dma.done [#allocation4], 128
    $region41: #{tpu_custom_call.1} parent=1 // pred_fallthru
      _
    %152 = vsyncpa [#allocation3], 1
    %153 = vsyncpa [#allocation6], 1
    %154 = vsyncpa [#allocation4], 1

</llo_original>
